<compile_context>
chip_gen: v7x
topology: tpu7x:2x2x1
jax: 0.10.0
libtpu: 0.0.40
codegen_flags: <defaults>
</compile_context>

<pallas_src>
import functools

import jax
import jax.numpy as jnp
from jax.experimental import pallas as pl
from jax.experimental.pallas import tpu as pltpu


def _round_up(x, m):
    return (x + m - 1) // m * m


def _matcher_kernel(z_ref, cand_ref, out_ref, *, use_mxu_dot):
    # z_ref   : (1, 1, D)   precomputed Linear output for this batch row (f32)
    # cand_ref: (1, TC, D)  candidate encodings for this tile
    # out_ref : (1, 1, TC)  similarities (lane-dense row)
    if use_mxu_dot:
        # MXU path (M=1 matvec): fine on v5e, MXU-bound on v6e/v7x.
        sim = jax.lax.dot_general(
            z_ref[0], cand_ref[0],
            dimension_numbers=(((1,), (1,)), ((), ())),
            preferred_element_type=jnp.float32)               # (1, TC)
    else:
        # VPU path: sublane-broadcast z, VPU multiply (dtype promotion keeps
        # bf16 candidates cheap), XLU lane-axis reduce, lane-dense row.
        prod = cand_ref[0] * z_ref[0]                         # (TC, D) f32
        sim = jnp.sum(prod, axis=-1)[None, :]                 # (1, TC)
    out_ref[0] = sim.astype(out_ref.dtype)


@functools.partial(jax.jit, static_argnames=("use_mxu_dot",))
def bilinear_matcher(ori_plan_encoding, candidate_plan_encodings, weight, bias,
                     use_mxu_dot=False):
    """JAX/Pallas equivalent of BilinearMatcher.forward.

    ori_plan_encoding:        (B, D)
    candidate_plan_encodings: (B, D) or (B, C, D)
    weight: (D, D) nn.Linear weight, bias: (D,)
    returns: similarities, shape (B*C,) float32 (C == 1 for 2-D candidates)
    """
    D = ori_plan_encoding.shape[-1]

    if candidate_plan_encodings.ndim == 2:
        cand = candidate_plan_encodings[:, None, :]           # C == 1
    else:
        cand = candidate_plan_encodings
    B, C, _ = cand.shape

    # Linear hoisted out of the kernel: one (B,D)@(D,D) MXU matmul in XLA,
    # f32 accumulation. z stays f32 end-to-end.
    z = jnp.dot(ori_plan_encoding, weight.T,
                preferred_element_type=jnp.float32)
    z = (z + bias.astype(jnp.float32)).reshape(B, 1, D)

    # Pad candidates only up to a multiple of 128 (<=127 wasted rows).
    c_pad = _round_up(C, 128)
    if c_pad != C:
        cand = jnp.pad(cand, ((0, 0), (0, c_pad - C), (0, 0)))

    # Candidate tile: ~4 MiB of candidate data per grid step (>=512 rows,
    # <=2048), a multiple of 128 lanes, capped at the padded C.
    itemsize = jnp.dtype(cand.dtype).itemsize
    tc = (4 * 1024 * 1024) // max(1, D * itemsize)
    tc = max(512, min(int(tc), 2048))
    tc = (tc // 128) * 128
    tc = min(tc, c_pad)

    grid = (B, pl.cdiv(c_pad, tc))                            # ragged last tile OK

    cand_block_bytes = tc * D * itemsize
    # 2 pipeline buffers for the cand stream + small z/out blocks + headroom,
    # capped at 64 MiB so a v6e-tuned tile never exceeds v7x physical VMEM.
    vmem_limit = int(min(64 * 1024 * 1024,
                         max(32 * 1024 * 1024, 4 * cand_block_bytes)))

    cost = pl.CostEstimate(
        flops=2 * B * c_pad * D,
        transcendentals=0,
        bytes_accessed=itemsize * B * c_pad * D + 4 * B * D + 4 * B * c_pad,
    )

    kernel = functools.partial(_matcher_kernel, use_mxu_dot=use_mxu_dot)

    out = pl.pallas_call(
        kernel,
        out_shape=jax.ShapeDtypeStruct((B, 1, c_pad), jnp.float32),
        grid_spec=pltpu.PrefetchScalarGridSpec(
            num_scalar_prefetch=0,
            grid=grid,
            in_specs=[
                pl.BlockSpec((1, 1, D), lambda b, j: (b, 0, 0)),    # z row
                pl.BlockSpec((1, tc, D), lambda b, j: (b, j, 0)),   # cand tile
            ],
            out_specs=pl.BlockSpec((1, 1, tc), lambda b, j: (b, 0, j)),
        ),
        compiler_params=pltpu.CompilerParams(
            dimension_semantics=("parallel", "parallel"),
            vmem_limit_bytes=vmem_limit),
        cost_estimate=cost,
    )(z, cand)

    # Padded (>=C) slots are sliced off before anything downstream sees them.
    return out[:, 0, :C].reshape(-1)


def _reference(ori, cand, weight, bias):
    cand3 = cand if cand.ndim == 3 else cand[:, None, :]
    z = ori @ weight.T + bias
    return jnp.einsum("bd,bcd->bc", z, cand3).reshape(-1)


if __name__ == "__main__":
    # Small deterministic example consistent with the module:
    #   batch B = 2, candidates C = 4, encoding_dim D = 32.
    B, C, D = 2, 4, 32
    key = jax.random.PRNGKey(0)
    k1, k2, k3, k4 = jax.random.split(key, 4)

    ori = jax.random.normal(k1, (B, D), dtype=jnp.float32)
    cand = jax.random.normal(k2, (B, C, D), dtype=jnp.float32)

    # Deterministic synthetic parameters for nn.Linear(D, D).
    weight = jax.random.normal(k3, (D, D), dtype=jnp.float32) * (1.0 / jnp.sqrt(D))
    bias = jax.random.normal(k4, (D,), dtype=jnp.float32) * 0.01

    # Default (VPU-reduce) path, 3-D candidates.
    sims = jax.block_until_ready(bilinear_matcher(ori, cand, weight, bias))
    ref = _reference(ori, cand, weight, bias)
    assert sims.shape == (B * C,)
    assert jnp.allclose(sims, ref, atol=1e-4, rtol=1e-4), (sims, ref)

    # 2-D candidate branch (C == 1).
    sims2 = jax.block_until_ready(
        bilinear_matcher(ori, cand[:, 0, :], weight, bias))
    ref2 = _reference(ori, cand[:, 0, :], weight, bias)
    assert sims2.shape == (B,)
    assert jnp.allclose(sims2, ref2, atol=1e-4, rtol=1e-4), (sims2, ref2)

    # MXU fallback path (kept for v5e-style gating).
    sims3 = jax.block_until_ready(
        bilinear_matcher(ori, cand, weight, bias, use_mxu_dot=True))
    assert jnp.allclose(sims3, ref, atol=1e-4, rtol=1e-4), (sims3, ref)

    print("KERNEL_OK")
</pallas_src>

<mosaic_0001>
module attributes {stable_mosaic.version = 11 : i64} {
  func.func @_matcher_kernel(%arg0: i32, %arg1: i32, %arg2: memref<1x1x32xf32, #tpu.memory_space<vmem>>, %arg3: memref<1x128x32xf32, #tpu.memory_space<vmem>>, %arg4: memref<1x1x128xf32, #tpu.memory_space<vmem>>) attributes {dimension_semantics = [#tpu.dimension_semantics<parallel>, #tpu.dimension_semantics<parallel>], iteration_bounds = array<i64: 2, 1>, scalar_prefetch = 0 : i64, scratch_operands = 0 : i64, tpu.core_type = #tpu.core_type<tc>, window_params = [{transform_indices = @transform_0, window_bounds = array<i64: 1, 1, 32>}, {transform_indices = @transform_1, window_bounds = array<i64: 1, 128, 32>}, {transform_indices = @transform_2, window_bounds = array<i64: 1, 1, 128>}]} {
    %c0 = arith.constant 0 : index
    %c0_0 = arith.constant 0 : index
    %c0_1 = arith.constant 0 : index
    %0 = vector.load %arg3[%c0, %c0_0, %c0_1] : memref<1x128x32xf32, #tpu.memory_space<vmem>>, vector<1x128x32xf32>
    %1 = vector.shape_cast %0 : vector<1x128x32xf32> to vector<128x32xf32>
    %c0_2 = arith.constant 0 : index
    %c0_3 = arith.constant 0 : index
    %c0_4 = arith.constant 0 : index
    %2 = vector.load %arg2[%c0_2, %c0_3, %c0_4] : memref<1x1x32xf32, #tpu.memory_space<vmem>>, vector<1x1x32xf32>
    %3 = vector.shape_cast %2 : vector<1x1x32xf32> to vector<1x32xf32>
    %4 = vector.broadcast %3 : vector<1x32xf32> to vector<128x32xf32>
    %5 = arith.mulf %1, %4 : vector<128x32xf32>
    %cst = arith.constant dense<0.000000e+00> : vector<128xf32>
    %6 = vector.multi_reduction <add>, %5, %cst [1] : vector<128x32xf32> to vector<128xf32>
    %7 = vector.shape_cast %6 : vector<128xf32> to vector<1x128xf32>
    %c0_5 = arith.constant 0 : index
    %c0_6 = arith.constant 0 : index
    %c0_7 = arith.constant 0 : index
    %8 = vector.load %arg4[%c0_5, %c0_6, %c0_7] : memref<1x1x128xf32, #tpu.memory_space<vmem>>, vector<1x1x128xf32>
    %9 = vector.shape_cast %8 : vector<1x1x128xf32> to vector<1x128xf32>
    %10 = vector.shape_cast %7 : vector<1x128xf32> to vector<1x1x128xf32>
    tpu.vector_store %arg4[%c0_5, %c0_6, %c0_7], %10 {strides = array<i32>} : memref<1x1x128xf32, #tpu.memory_space<vmem>>, vector<1x1x128xf32>,
    return
  }
  func.func @transform_0(%arg0: i32, %arg1: i32) -> (i32, i32, i32) {
    %c0_i32 = arith.constant 0 : i32
    %c0_i32_0 = arith.constant 0 : i32
    %c0_i32_1 = arith.constant 0 : i32
    return %arg0, %c0_i32, %c0_i32_0 : i32, i32, i32
  }
  func.func @transform_1(%arg0: i32, %arg1: i32) -> (i32, i32, i32) {
    %c0_i32 = arith.constant 0 : i32
    %c0_i32_0 = arith.constant 0 : i32
    return %arg0, %arg1, %c0_i32 : i32, i32, i32
  }
  func.func @transform_2(%arg0: i32, %arg1: i32) -> (i32, i32, i32) {
    %c0_i32 = arith.constant 0 : i32
    %c0_i32_0 = arith.constant 0 : i32
    return %arg0, %c0_i32, %arg1 : i32, i32, i32
  }
}

</mosaic_0001>

<llo_original>
// kernel: squeeze.1
$region0: #{squeeze.1}
  %s0 = inlined_call_operand.vmem [shape: f32[2,4], index: 0, kind: input, shape index: {}]
  %s1 = inlined_call_operand.hbm [shape: f32[8], index: 1, kind: output, shape index: {}]
  $region1: #{squeeze.1} parent=0
    #allocation0 [shape = 'u8[512]{0}', space=vmem, size = 0x400, scoped, tag = 'operand span for operand 1']
    #allocation1 [shape = 's32[1]{0}', space=sflag, size = 0x4, scoped, tag = 'scoped memory for squeeze.1']
    #allocation2 [shape = 'u8[4096]{0}', space=vmem, size = 0x1000, scoped, tag = 'scoped mem for output reshape']
    #allocation3 [shape = 'u8[4096]{0}', space=vmem, size = 0x1000, scoped, tag = 'scoped mem for input reshape']
    %2 = vsyncpa [#allocation1], 0
    %s4 = sshllo.u32 0, 2
    %v5 = vld [vmem:[%s0] sm:%s4]
    %6 = vst [vmem:[#allocation3] sm:%s4] %v5
    %v7 = vld [vmem:[#allocation3] sm:$0x1]
    %vm8 = vcmask 31744
    %9 = vst.msk [vmem:[#allocation2] sm:$0x1] %vm8, %v7
    %s10 = scalar_lea.vmem [#allocation3], 1
    %v11 = vld [vmem:[%s10] sm:$0x1]
    %12 = vrot.lane.b32.xlu0 %v11, 4
    %v13 = vpop.permute.xlu0 %12
    %vm14 = vcmask 64544
    %15 = vst.msk [vmem:[#allocation2] sm:$0x1] %vm14, %v13
    %s17 = sshllo.u32 0, 1
    %v19 = vld [vmem:[#allocation2] sm:%s17]
    %s20 = sshllo.u32 0, 1
    %21 = vst [vmem:[#allocation0] sm:%s20] %v19
    %s23 = ssub.s32 16, 16
    %24 = vsyncadd [#allocation1], %s23
    %s26 = sshll.u32 [#allocation0], 4
    %s27 = int_to_ptr.vmem [resolvable:$true] %s26
    %29 = dma.vmem_to_hbm [thread:$0]  %s27, 16, %s1, [#allocation1]
    %30 = dma.done [#allocation1], 16
    %31 = vsyncpa [#allocation1], 1

// kernel: bilinear_matcher.1
$region0: #{bilinear_matcher.1}
  #allocation0 [shape = 'u32[]', space=smem, size = 0x4, offset = 0x4, fixed_abs, tag = 'smem constant byte address 0x4 - core index']
  #allocation1 [shape = 'u32[144,128]{1,0:T(1,128)}', space=vmem, size = 0x12000, scoped, tag = 'internal scratch']
  %s0 = inlined_call_operand.vmem [shape: f32[2,1,32], index: 0, kind: input, shape index: {}]
  %s1 = inlined_call_operand.vmem [shape: f32[2,128,32], index: 1, kind: input, shape index: {}]
  %s2 = inlined_call_operand.vmem [shape: f32[2,1,128], index: 2, kind: output, shape index: {}]
  %s3 = sld [smem:[#allocation0]]
  $region41: #{bilinear_matcher.1} parent=0
    _
  %s5 = ssub.s32 1, %s3
  %s6 = scalar_select 0, %s5, %s3
  loop: start=0, step=1, limit=4
  $region2: #{bilinear_matcher.1} parent=0 // loop_pre_header
    _
  $region3: #{bilinear_matcher.1} parent=0 // loop_header
    %s8 = sphi 0, %s12
    %p9 = scmp.ge.s32.totalorder %s8, 4
    %s15 = sphi 0, %s27
    %s16 = sphi 0, %s23
    %s17 = sphi 0, %s15
    %s18 = sphi 0, %s16
    %s19 = sphi 0, %s17
    %s20 = sphi 0, %s18
    %s30 = sphi 0, %s32
    %s33 = sphi 0, %s30
    %s34 = sphi 0, %s33
    %s50 = sphi 0, %s34
    %s58 = sphi 0, %s60
    %s61 = sphi 0, %s58
    %s62 = sphi 0, %s61
    %s78 = sphi 0, %s62
    %s86 = sphi 0, %s88
    %s89 = sphi 0, %s86
    %s90 = sphi 0, %s89
    %s106 = sphi 0, %s90
  $region4: #{bilinear_matcher.1} parent=0 // loop_header_branch
    %11 = sbr.rel (%p9) target = $region8
  $region5: #{bilinear_matcher.1} parent=0 // loop_body
    %s13 = ssub.s32 %s8, 1
    %s14 = ssub.s32 %s8, 2
    %s21 = sadd.s32 1, %s16
    %p22 = scmp.ge.s32.totalorder %s21, 1
    %s23 = scalar_select %p22, 0, %s21
    %s24 = sadd.s32 1, %s15
    %s25 = scalar_select %p22, %s24, %s15
    %p26 = scmp.ge.s32.totalorder %s25, 2
    %s27 = scalar_select %p26, 0, %s25
    %s28 = ssub.s32 %s15, %s27
    %p29 = scmp.eq.s32.totalorder %s28, 0
    %s31 = sadd.s32 %s30, 1
    %s32 = scalar_select %p29, %s30, %s31
    %p35 = pneg %p29
    %p36 = scmp.eq.s32.totalorder %s8, 1
    %p37 = por %p35, %p36
    %p38 = scmp.ne.s32.totalorder %s30, %s33
    %p39 = scmp.eq.s32.totalorder %s8, 0
    %p40 = por %p38, %p39
    %p41 = scmp.ne.s32.totalorder %s30, %s33
    %p42 = scmp.eq.s32.totalorder %s13, 1
    %p43 = por %p41, %p42
    %p44 = scmp.ne.s32.totalorder %s33, %s34
    %p45 = scmp.eq.s32.totalorder %s13, 0
    %p46 = por %p44, %p45
    %p47 = scmp.ne.s32.totalorder %s33, %s34
    %p48 = scmp.eq.s32.totalorder %s14, 1
    %p49 = por %p47, %p48
    %p51 = scmp.ne.s32.totalorder %s34, %s50
    %p52 = scmp.eq.s32.totalorder %s14, 0
    %p53 = por %p51, %p52
    %s54 = ssub.s32 %s15, %s27
    %s55 = ssub.s32 %s16, %s23
    %s56 = sor.u32 %s54, %s55
    %p57 = scmp.eq.s32.totalorder %s56, 0
    %s59 = sadd.s32 %s58, 1
    %s60 = scalar_select %p57, %s58, %s59
    %p63 = pneg %p57
    %p64 = scmp.eq.s32.totalorder %s8, 1
    %p65 = por %p63, %p64
    %p66 = scmp.ne.s32.totalorder %s58, %s61
    %p67 = scmp.eq.s32.totalorder %s8, 0
    %p68 = por %p66, %p67
    %p69 = scmp.ne.s32.totalorder %s58, %s61
    %p70 = scmp.eq.s32.totalorder %s13, 1
    %p71 = por %p69, %p70
    %p72 = scmp.ne.s32.totalorder %s61, %s62
    %p73 = scmp.eq.s32.totalorder %s13, 0
    %p74 = por %p72, %p73
    %p75 = scmp.ne.s32.totalorder %s61, %s62
    %p76 = scmp.eq.s32.totalorder %s14, 1
    %p77 = por %p75, %p76
    %p79 = scmp.ne.s32.totalorder %s62, %s78
    %p80 = scmp.eq.s32.totalorder %s14, 0
    %p81 = por %p79, %p80
    %s82 = ssub.s32 %s15, %s27
    %s83 = ssub.s32 %s16, %s23
    %s84 = sor.u32 %s82, %s83
    %p85 = scmp.eq.s32.totalorder %s84, 0
    %s87 = sadd.s32 %s86, 1
    %s88 = scalar_select %p85, %s86, %s87
    %p91 = pneg %p85
    %p92 = scmp.eq.s32.totalorder %s8, 1
    %p93 = por %p91, %p92
    %p94 = scmp.ne.s32.totalorder %s86, %s89
    %p95 = scmp.eq.s32.totalorder %s8, 0
    %p96 = por %p94, %p95
    %p97 = scmp.ne.s32.totalorder %s86, %s89
    %p98 = scmp.eq.s32.totalorder %s13, 1
    %p99 = por %p97, %p98
    %p100 = scmp.ne.s32.totalorder %s89, %s90
    %p101 = scmp.eq.s32.totalorder %s13, 0
    %p102 = por %p100, %p101
    %p103 = scmp.ne.s32.totalorder %s89, %s90
    %p104 = scmp.eq.s32.totalorder %s14, 1
    %p105 = por %p103, %p104
    %p107 = scmp.ne.s32.totalorder %s90, %s106
    %p108 = scmp.eq.s32.totalorder %s14, 0
    %p109 = por %p107, %p108
    %p110 = scmp.le.s32.totalorder 1, %s8
    %p111 = scmp.lt.s32.totalorder %s8, 3
    %p112 = pnand %p110, %p111
    %p113 = pneg %p112
    // Predicated region
    $region9: #{bilinear_matcher.1} parent=5 // pred_check
      _
    $region10: #{bilinear_matcher.1} parent=5 // pred_check_branch
      %115 = sbr.rel (%p112) target = $region12
    $region11: #{bilinear_matcher.1} parent=5 // pred_region
      %s116 = ssub.s32 %s8, 1
    $region12: #{bilinear_matcher.1} parent=5 // pred_fallthru
      _
    %p117 = scmp.lt.s32.totalorder %s8, 2
    // Predicated region
    $region13: #{bilinear_matcher.1} parent=5 // pred_check
      %p118 = pneg %p117
    $region14: #{bilinear_matcher.1} parent=5 // pred_check_branch
      %120 = sbr.rel (%p118) target = $region16
    $region15: #{bilinear_matcher.1} parent=5 // pred_region
      // Predicated region
      $region17: #{bilinear_matcher.1} parent=15 // pred_check
        %p121 = pneg %p40
      $region18: #{bilinear_matcher.1} parent=15 // pred_check_branch
        %123 = sbr.rel (%p121) target = $region20
      $region19: #{bilinear_matcher.1} parent=15 // pred_region
        %p124 = scmp.lt.s32.totalorder %s15, 1
        %s125 = scalar_select %p124, %s15, 1
        %s126 = scalar_lea.vmem %s0, %s125
      $region20: #{bilinear_matcher.1} parent=15 // pred_fallthru
        _
      // Predicated region
      $region21: #{bilinear_matcher.1} parent=15 // pred_check
        %p127 = pneg %p68
      $region22: #{bilinear_matcher.1} parent=15 // pred_check_branch
        %129 = sbr.rel (%p127) target = $region24
      $region23: #{bilinear_matcher.1} parent=15 // pred_region
        %s130 = smul.u32 16, %s16
        %p131 = scmp.lt.s32.totalorder %s15, 1
        %s132 = scalar_select %p131, %s15, 1
        %p133 = scmp.lt.s32.totalorder %s130, 15
        %s134 = scalar_select %p133, %s130, 15
        %s135 = smul.addr %s132, 16
        %s136 = sadd.s32 %s134, %s135
        %s137 = smul.addr %s136, 8
        %s138 = scalar_lea.vmem %s1, %s137
        %s139 = smul.u32 16, %s16
      $region24: #{bilinear_matcher.1} parent=15 // pred_fallthru
        _
    $region16: #{bilinear_matcher.1} parent=5 // pred_fallthru
      _
    %p140 = scmp.le.s32.totalorder 1, %s8
    %p141 = scmp.lt.s32.totalorder %s8, 3
    %p142 = pnand %p140, %p141
    %p143 = pneg %p142
    // Predicated region
    $region25: #{bilinear_matcher.1} parent=5 // pred_check
      _
    $region26: #{bilinear_matcher.1} parent=5 // pred_check_branch
      %145 = sbr.rel (%p142) target = $region28
    $region27: #{bilinear_matcher.1} parent=5 // pred_region
      %s146 = ssub.s32 %s8, 1
      %p147 = scmp.lt.s32.totalorder %s17, 1
      %s148 = scalar_select %p147, %s17, 1
      %s149 = scalar_lea.vmem %s0, %s148
      %p150 = pneg %p46
      %p151 = pneg %p43
      %s152 = smul.u32 16, %s18
      %p153 = scmp.lt.s32.totalorder %s17, 1
      %s154 = scalar_select %p153, %s17, 1
      %p155 = scmp.lt.s32.totalorder %s152, 15
      %s156 = scalar_select %p155, %s152, 15
      %s157 = smul.addr %s154, 16
      %s158 = sadd.s32 %s156, %s157
      %s159 = smul.addr %s158, 8
      %s160 = scalar_lea.vmem %s1, %s159
      %p161 = pneg %p74
      %p162 = pneg %p71
      %p163 = pneg %p102
      %p164 = pneg %p99
      %p165 = scmp.lt.s32.totalorder %s17, 1
      %s166 = scalar_select %p165, %s17, 1
      %p167 = scmp.lt.s32.totalorder %s18, 0
      %s168 = scalar_select %p167, %s18, 0
      %s169 = sadd.s32 %s168, %s166
      %s170 = scalar_lea.vmem %s2, %s169
      %p171 = scmp.lt.s32.totalorder %s17, 1
      %s172 = scalar_select %p171, %s17, 1
      %s173 = scalar_lea.vmem %s0, %s172
      %s174 = smul.u32 16, %s18
      %p175 = scmp.lt.s32.totalorder %s17, 1
      %s176 = scalar_select %p175, %s17, 1
      %p177 = scmp.lt.s32.totalorder %s174, 15
      %s178 = scalar_select %p177, %s174, 15
      %s179 = smul.addr %s176, 16
      %s180 = sadd.s32 %s178, %s179
      %s181 = smul.addr %s180, 8
      %s182 = scalar_lea.vmem %s1, %s181
      %s183 = smul.u32 16, %s18
      %p184 = scmp.lt.s32.totalorder %s17, 1
      %s185 = scalar_select %p184, %s17, 1
      %p186 = scmp.lt.s32.totalorder %s18, 0
      %s187 = scalar_select %p186, %s18, 0
      %s188 = sadd.s32 %s187, %s185
      %s189 = scalar_lea.vmem %s2, %s188
      %v190 = vld [vmem:[%s182] sm:$0xff]
      %v191 = vld [vmem:[%s182 + $0x8] sm:$0xff]
      %v192 = vld [vmem:[%s182 + $0x10] sm:$0xff]
      %v193 = vld [vmem:[%s182 + $0x18] sm:$0xff]
      %v194 = vld [vmem:[%s182 + $0x20] sm:$0xff]
      %v195 = vld [vmem:[%s182 + $0x28] sm:$0xff]
      %v196 = vld [vmem:[%s182 + $0x30] sm:$0xff]
      %v197 = vld [vmem:[%s182 + $0x38] sm:$0xff]
      %v198 = vld [vmem:[%s182 + $0x40] sm:$0xff]
      %v199 = vld [vmem:[%s182 + $0x48] sm:$0xff]
      %v200 = vld [vmem:[%s182 + $0x50] sm:$0xff]
      %v201 = vld [vmem:[%s182 + $0x58] sm:$0xff]
      %v202 = vld [vmem:[%s182 + $0x60] sm:$0xff]
      %v203 = vld [vmem:[%s182 + $0x68] sm:$0xff]
      %v204 = vld [vmem:[%s182 + $0x70] sm:$0xff]
      %v205 = vld [vmem:[%s182 + $0x78] sm:$0xff]
      %v206 = vld [vmem:[%s173] sm:$0x1]
      %v208 = vlaneseq
      %v209 = vshrl.u32 %v208, 7
      %v210 = vsub.s32 0, %v209
      %v211 = vrot.slane %v206, %v210
      %v213 = vmul.f32 %v190, %v211
      %v214 = vmul.f32 %v191, %v211
      %v215 = vmul.f32 %v192, %v211
      %v216 = vmul.f32 %v193, %v211
      %v217 = vmul.f32 %v194, %v211
      %v218 = vmul.f32 %v195, %v211
      %v219 = vmul.f32 %v196, %v211
      %v220 = vmul.f32 %v197, %v211
      %v221 = vmul.f32 %v198, %v211
      %v222 = vmul.f32 %v199, %v211
      %v223 = vmul.f32 %v200, %v211
      %v224 = vmul.f32 %v201, %v211
      %v225 = vmul.f32 %v202, %v211
      %v226 = vmul.f32 %v203, %v211
      %v227 = vmul.f32 %v204, %v211
      %v228 = vmul.f32 %v205, %v211
      %vm229 = vcmask 261120
      %v230 = vsel %vm229, %v213, 0.0
      %231 = vadd.xlane.f32.xlu0 %v230
      %v232 = vpop.xlane.xlu0 %231
      %v233 = vsel %vm229, %v214, 0.0
      %234 = vadd.xlane.f32.xlu0 %v233
      %v235 = vpop.xlane.xlu0 %234
      %v236 = vsel %vm229, %v215, 0.0
      %237 = vadd.xlane.f32.xlu0 %v236
      %v238 = vpop.xlane.xlu0 %237
      %v239 = vsel %vm229, %v216, 0.0
      %240 = vadd.xlane.f32.xlu0 %v239
      %v241 = vpop.xlane.xlu0 %240
      %v242 = vsel %vm229, %v217, 0.0
      %243 = vadd.xlane.f32.xlu0 %v242
      %v244 = vpop.xlane.xlu0 %243
      %v245 = vsel %vm229, %v218, 0.0
      %246 = vadd.xlane.f32.xlu0 %v245
      %v247 = vpop.xlane.xlu0 %246
      %v248 = vsel %vm229, %v219, 0.0
      %249 = vadd.xlane.f32.xlu0 %v248
      %v250 = vpop.xlane.xlu0 %249
      %v251 = vsel %vm229, %v220, 0.0
      %252 = vadd.xlane.f32.xlu0 %v251
      %v253 = vpop.xlane.xlu0 %252
      %v254 = vsel %vm229, %v221, 0.0
      %255 = vadd.xlane.f32.xlu0 %v254
      %v256 = vpop.xlane.xlu0 %255
      %v257 = vsel %vm229, %v222, 0.0
      %258 = vadd.xlane.f32.xlu0 %v257
      %v259 = vpop.xlane.xlu0 %258
      %v260 = vsel %vm229, %v223, 0.0
      %261 = vadd.xlane.f32.xlu0 %v260
      %v262 = vpop.xlane.xlu0 %261
      %v263 = vsel %vm229, %v224, 0.0
      %264 = vadd.xlane.f32.xlu0 %v263
      %v265 = vpop.xlane.xlu0 %264
      %v266 = vsel %vm229, %v225, 0.0
      %267 = vadd.xlane.f32.xlu0 %v266
      %v268 = vpop.xlane.xlu0 %267
      %v269 = vsel %vm229, %v226, 0.0
      %270 = vadd.xlane.f32.xlu0 %v269
      %v271 = vpop.xlane.xlu0 %270
      %v272 = vsel %vm229, %v227, 0.0
      %273 = vadd.xlane.f32.xlu0 %v272
      %v274 = vpop.xlane.xlu0 %273
      %v275 = vsel %vm229, %v228, 0.0
      %276 = vadd.xlane.f32.xlu0 %v275
      %v277 = vpop.xlane.xlu0 %276
      %v294 = vlaneseq
      %v295 = vand.u32 %v294, 127
      %v296 = vlaneseq
      %v297 = vshrl.u32 %v296, 7
      %v298 = vsub.s32 %v295, %v297
      %v299 = vrot.slane %v232, %v298
      %v300 = vadd.s32 %v295, 4294967288
      %v301 = vlaneseq
      %v302 = vshrl.u32 %v301, 7
      %v303 = vsub.s32 %v300, %v302
      %v304 = vrot.slane %v235, %v303
      %vm305 = vcmask 130112
      %v306 = vsel %vm305, %v304, %v299
      %v307 = vadd.s32 %v295, 4294967280
      %v308 = vlaneseq
      %v309 = vshrl.u32 %v308, 7
      %v310 = vsub.s32 %v307, %v309
      %v311 = vrot.slane %v238, %v310
      %vm312 = vcmask 195712
      %v313 = vsel %vm312, %v311, %v306
      %v314 = vadd.s32 %v295, 4294967272
      %v315 = vlaneseq
      %v316 = vshrl.u32 %v315, 7
      %v317 = vsub.s32 %v314, %v316
      %v318 = vrot.slane %v241, %v317
      %vm319 = vcmask 261312
      %v320 = vsel %vm319, %v318, %v313
      %v321 = vadd.s32 %v295, 4294967264
      %v322 = vlaneseq
      %v323 = vshrl.u32 %v322, 7
      %v324 = vsub.s32 %v321, %v323
      %v325 = vrot.slane %v244, %v324
      %vm326 = vcmask 326912
      %v327 = vsel %vm326, %v325, %v320
      %v328 = vadd.s32 %v295, 4294967256
      %v329 = vlaneseq
      %v330 = vshrl.u32 %v329, 7
      %v331 = vsub.s32 %v328, %v330
      %v332 = vrot.slane %v247, %v331
      %vm333 = vcmask 392512
      %v334 = vsel %vm333, %v332, %v327
      %v335 = vadd.s32 %v295, 4294967248
      %v336 = vlaneseq
      %v337 = vshrl.u32 %v336, 7
      %v338 = vsub.s32 %v335, %v337
      %v339 = vrot.slane %v250, %v338
      %vm340 = vcmask 458112
      %v341 = vsel %vm340, %v339, %v334
      %v342 = vadd.s32 %v295, 4294967240
      %v343 = vlaneseq
      %v344 = vshrl.u32 %v343, 7
      %v345 = vsub.s32 %v342, %v344
      %v346 = vrot.slane %v253, %v345
      %vm347 = vcmask 523712
      %v348 = vsel %vm347, %v346, %v341
      %v349 = vadd.s32 %v295, 4294967232
      %v350 = vlaneseq
      %v351 = vshrl.u32 %v350, 7
      %v352 = vsub.s32 %v349, %v351
      %v353 = vrot.slane %v256, %v352
      %vm354 = vcmask 589312
      %v355 = vsel %vm354, %v353, %v348
      %v356 = vadd.s32 %v295, 4294967224
      %v357 = vlaneseq
      %v358 = vshrl.u32 %v357, 7
      %v359 = vsub.s32 %v356, %v358
      %v360 = vrot.slane %v259, %v359
      %vm361 = vcmask 654912
      %v362 = vsel %vm361, %v360, %v355
      %v363 = vadd.s32 %v295, 4294967216
      %v364 = vlaneseq
      %v365 = vshrl.u32 %v364, 7
      %v366 = vsub.s32 %v363, %v365
      %v367 = vrot.slane %v262, %v366
      %vm368 = vcmask 720512
      %v369 = vsel %vm368, %v367, %v362
      %v370 = vadd.s32 %v295, 4294967208
      %v371 = vlaneseq
      %v372 = vshrl.u32 %v371, 7
      %v373 = vsub.s32 %v370, %v372
      %v374 = vrot.slane %v265, %v373
      %vm375 = vcmask 786112
      %v376 = vsel %vm375, %v374, %v369
      %v377 = vadd.s32 %v295, 4294967200
      %v378 = vlaneseq
      %v379 = vshrl.u32 %v378, 7
      %v380 = vsub.s32 %v377, %v379
      %v381 = vrot.slane %v268, %v380
      %vm382 = vcmask 851712
      %v383 = vsel %vm382, %v381, %v376
      %v384 = vadd.s32 %v295, 4294967192
      %v385 = vlaneseq
      %v386 = vshrl.u32 %v385, 7
      %v387 = vsub.s32 %v384, %v386
      %v388 = vrot.slane %v271, %v387
      %vm389 = vcmask 917312
      %v390 = vsel %vm389, %v388, %v383
      %v391 = vadd.s32 %v295, 4294967184
      %v392 = vlaneseq
      %v393 = vshrl.u32 %v392, 7
      %v394 = vsub.s32 %v391, %v393
      %v395 = vrot.slane %v274, %v394
      %vm396 = vcmask 982912
      %v397 = vsel %vm396, %v395, %v390
      %v398 = vadd.s32 %v295, 4294967176
      %v399 = vlaneseq
      %v400 = vshrl.u32 %v399, 7
      %v401 = vsub.s32 %v398, %v400
      %v402 = vrot.slane %v277, %v401
      %vm403 = vcmask 1048512
      %v404 = vsel %vm403, %v402, %v397
      %406 = vst [vmem:[%s189] sm:$0x1] %v404
      %p407 = scmp.lt.s32.totalorder %s17, 1
      %s408 = scalar_select %p407, %s17, 1
      %p409 = scmp.lt.s32.totalorder %s18, 0
      %s410 = scalar_select %p409, %s18, 0
      %s411 = sadd.s32 %s410, %s408
      %s412 = scalar_lea.vmem %s2, %s411
      // Predicated region
      $region29: #{bilinear_matcher.1} parent=27 // pred_check
        %p413 = pneg %p99
      $region30: #{bilinear_matcher.1} parent=27 // pred_check_branch
        %415 = sbr.rel (%p413) target = $region32
      $region31: #{bilinear_matcher.1} parent=27 // pred_region
        _
      $region32: #{bilinear_matcher.1} parent=27 // pred_fallthru
        _
    $region28: #{bilinear_matcher.1} parent=5 // pred_fallthru
      _
    %p416 = scmp.le.s32.totalorder 2, %s8
    // Predicated region
    $region33: #{bilinear_matcher.1} parent=5 // pred_check
      %p417 = pneg %p416
    $region34: #{bilinear_matcher.1} parent=5 // pred_check_branch
      %419 = sbr.rel (%p417) target = $region36
    $region35: #{bilinear_matcher.1} parent=5 // pred_region
      %s420 = ssub.s32 %s8, 2
      // Predicated region
      $region37: #{bilinear_matcher.1} parent=35 // pred_check
        %p421 = pneg %p105
      $region38: #{bilinear_matcher.1} parent=35 // pred_check_branch
        %423 = sbr.rel (%p421) target = $region40
      $region39: #{bilinear_matcher.1} parent=35 // pred_region
        %p424 = scmp.lt.s32.totalorder %s19, 1
        %s425 = scalar_select %p424, %s19, 1
        %p426 = scmp.lt.s32.totalorder %s20, 0
        %s427 = scalar_select %p426, %s20, 0
        %s428 = sadd.s32 %s427, %s425
        %s429 = scalar_lea.vmem %s2, %s428
      $region40: #{bilinear_matcher.1} parent=35 // pred_fallthru
        _
    $region36: #{bilinear_matcher.1} parent=5 // pred_fallthru
      _
  $region6: #{bilinear_matcher.1} parent=0 // loop_footer
    %s12 = sadd.s32 1, %s8
  $region7: #{bilinear_matcher.1} parent=0 // loop_footer_branch
    %7 = sbr.rel target = $region3
  $region8: #{bilinear_matcher.1} parent=0 // loop_exit
    _

</llo_original>
